<compile_context>
chip_gen: v6e
topology: v6e:2x2x1
jax: 0.10.0
libtpu: 0.0.40
codegen_flags: <defaults>
</compile_context>

<pallas_src>
import functools

import jax
import jax.numpy as jnp
from jax.experimental import pallas as pl
from jax.experimental.pallas import tpu as pltpu


def _soft_moe_kernel(d, x_ref, g_ref, w_ref, b_ref, o_ref):
    """One grid step == (batch b, token tile t), channel-major layout.

    x_ref : (1, d, mt)   bf16 tile (channels on sublanes, tokens on lanes)
    g_ref : (1, 1, 2)    f32  per-batch global expert scores [g0, g1]
    w_ref : (R_pad, d)   bf16 fused [s0*We0^T ; s1*We1^T ; Wphi[:, :2]^T ; 0-pad]
    b_ref : (R_pad, 1)   f32  matching fused biases (0 in the pad rows)
    o_ref : (1, d, mt)   output tile, written directly in NCHW layout
    """
    x = x_ref[0]                                      # (d, mt) bf16 MXU operand
    # Single fused MXU pass over the tile: expert0 | expert1 | gate logits.
    y = jnp.dot(w_ref[...], x, preferred_element_type=jnp.float32) + b_ref[...]
    e0 = y[:d]                                        # (d, mt) scaled expert 0 (transposed)
    e1 = y[d:2 * d]                                   # (d, mt) scaled expert 1
    gate = jax.nn.sigmoid(y[2 * d:2 * d + 2])         # (2, mt) local gates D[:, :, :2]^T
    g = g_ref[0]                                      # (1, 2)  f32 global scores
    out = e0 * (gate[0:1] * g[:, 0:1]) + e1 * (gate[1:2] * g[:, 1:2])
    o_ref[0] = out.astype(o_ref.dtype)


def _vmem_limit_bytes():
    """Scoped-VMEM limit: ~75% of physical capacity, capped at 96 MiB."""
    try:
        cap = pltpu.get_tpu_info().vmem_capacity_bytes
    except Exception:  # conservative fallback = v7x per-core VMEM
        cap = 64 * 1024 * 1024
    return int(min(96 * 1024 * 1024, cap * 3 // 4))


def _pick_m_tile(m, d, w_bytes, out_itemsize, vmem_limit):
    """Largest lane-dense (multiple of 128) token tile fitting the VMEM budget.

    Per-step steady-state bytes per (channel, token):
      bf16 x (2 bufs) + out (2 bufs) + f32 y (~2d rows) + f32 epilogue temps/copies.
    Leaves ~25% of the scoped limit as slack for compiler scratch & semaphores.
    """
    budget = vmem_limit * 3 // 4 - w_bytes
    per_token = d * (2 * 2 + 2 * out_itemsize + 8 + 8 + 4)
    t = max(128, min(2048, (budget // per_token) // 128 * 128))
    t = min(t, (m + 127) // 128 * 128)     # never wider than the padded token axis
    return int(t)


def soft_moe_layer(x_nchw, params, scales, out_dtype=None):
    """Conv (4D) path of SoftMoELayer.forward. Returns NCHW, same as PyTorch."""
    wphi, bphi, we, be, wsc, bsc = params
    B, d, H, W = x_nchw.shape
    m = H * W
    n = wphi.shape[1]
    d2 = wsc.shape[-1]
    out_dtype = x_nchw.dtype if out_dtype is None else out_dtype

    # forward() uses exactly two experts (face / hand) and pools to per-channel
    # means on the conv path, so d2 must equal d.
    assert we.shape[0] == 2 and len(scales) == 2 and n >= 2, "exactly 2 experts expected"
    assert d2 == d, "conv path requires d2 == d (pooled features are per-channel)"

    s0, s1 = float(scales[0]), float(scales[1])

    # NCHW -> (B, d, m): pure reshape, no HBM transpose.
    x_cd = x_nchw.reshape(B, d, m)

    # Global scores in f32 in the wrapper (tiny; one mean pass over x, fused by
    # XLA with the bf16 cast below).  Experts are affine 1x1 maps, so
    # pool(expert_i(X)) == expert_i(mean(X)).
    x_mean = jnp.mean(x_cd.astype(jnp.float32), axis=2)                  # (B, d)
    g_cols = []
    for i, s in enumerate((s0, s1)):
        pooled = (x_mean @ we[i].astype(jnp.float32)
                  + be[i].astype(jnp.float32)) * s                       # (B, d)
        g_cols.append(jax.nn.sigmoid(
            pooled @ wsc[i].astype(jnp.float32).T
            + bsc[i].astype(jnp.float32)))                               # (B, 1)
    g = jnp.concatenate(g_cols, axis=1).reshape(B, 1, 2)                 # (B, 1, 2) f32

    # --- Fused weight / bias (tiny, trace-time; scales folded in). ------------
    w0t = we[0].astype(jnp.float32).T * s0                               # (d, d)
    w1t = we[1].astype(jnp.float32).T * s1                               # (d, d)
    wgt = wphi[:, :2].astype(jnp.float32).T                              # (2, d)
    b0t = be[0].astype(jnp.float32).T * s0                               # (d, 1)
    b1t = be[1].astype(jnp.float32).T * s1
    bgt = bphi[:, :2].astype(jnp.float32).T                              # (2, 1)
    R = 2 * d + 2
    R_pad = (R + 15) // 16 * 16                                          # bf16 sublane packing
    w_all = jnp.concatenate([w0t, w1t, wgt], axis=0)
    b_all = jnp.concatenate([b0t, b1t, bgt], axis=0)
    if R_pad != R:
        w_all = jnp.pad(w_all, ((0, R_pad - R), (0, 0)))
        b_all = jnp.pad(b_all, ((0, R_pad - R), (0, 0)))
    w_all = w_all.astype(jnp.bfloat16)                                   # (R_pad, d) bf16
    b_all = b_all.astype(jnp.float32)                                    # (R_pad, 1) f32

    vmem_limit = _vmem_limit_bytes()
    m_tile = _pick_m_tile(m, d, int(w_all.size) * 2,
                          jnp.dtype(out_dtype).itemsize, vmem_limit)
    m_pad = (m + m_tile - 1) // m_tile * m_tile
    n_mt = m_pad // m_tile

    # bf16 tokens into the kernel; pad the token axis so every tile is lane-dense
    # (pad tokens are zeros, already excluded from x_mean, sliced off below).
    x_bf = x_cd.astype(jnp.bfloat16)
    if m_pad != m:
        x_bf = jnp.pad(x_bf, ((0, 0), (0, 0), (0, m_pad - m)))

    kernel = functools.partial(_soft_moe_kernel, d)

    def _build_call(single_buffer_weights):
        wkw = {"pipeline_mode": pl.Buffered(1)} if single_buffer_weights else {}
        return pl.pallas_call(
            kernel,
            out_shape=jax.ShapeDtypeStruct((B, d, m_pad), out_dtype),
            grid_spec=pltpu.PrefetchScalarGridSpec(
                num_scalar_prefetch=0,
                grid=(B, n_mt),
                in_specs=[
                    pl.BlockSpec((1, d, m_tile), lambda b, t: (b, 0, t)),   # x tile (bf16)
                    pl.BlockSpec((1, 1, 2), lambda b, t: (b, 0, 0)),        # global scores
                    # Resident fused weight / bias: constant index map, single buffer.
                    pl.BlockSpec((R_pad, d), lambda b, t: (0, 0), **wkw),
                    pl.BlockSpec((R_pad, 1), lambda b, t: (0, 0), **wkw),
                ],
                out_specs=pl.BlockSpec((1, d, m_tile), lambda b, t: (b, 0, t)),
            ),
            compiler_params=pltpu.CompilerParams(
                dimension_semantics=("parallel", "parallel"),
                vmem_limit_bytes=vmem_limit,
            ),
        )

    try:
        y_cd = _build_call(True)(x_bf, g, w_all, b_all)
    except Exception:
        # Fallback for toolchains where single-buffer pipeline_mode is unsupported:
        # the resident weights simply keep the default double buffer.
        y_cd = _build_call(False)(x_bf, g, w_all, b_all)

    # (B, d, m_pad) -> drop pad tokens -> NCHW: pure reshape, no transpose.
    return y_cd[:, :, :m].reshape(B, d, H, W)


def soft_moe_ref(x_nchw, params, scales):
    """Pure-JAX f32 reference of the same forward pass (for verification)."""
    wphi, bphi, we, be, wsc, bsc = params
    B, d, H, W = x_nchw.shape
    m = H * W
    x = jnp.transpose(x_nchw, (0, 2, 3, 1)).reshape(B, m, d)
    gate = jax.nn.sigmoid(x @ wphi + bphi)                               # (B, m, n)
    out = jnp.zeros_like(x)
    for i in range(2):
        e = (x @ we[i] + be[i]) * scales[i]                              # (B, m, d)
        pooled = jnp.mean(e, axis=1, keepdims=True)                      # (B, 1, d)
        g = jax.nn.sigmoid(
            jnp.sum(pooled * wsc[i], axis=-1, keepdims=True) + bsc[i])   # (B, 1, 1)
        out = out + e * gate[:, :, i:i + 1] * g
    return jnp.transpose(out.reshape(B, H, W, d), (0, 3, 1, 2))


def make_params(key, d, n, d2):
    """Deterministic synthetic parameters (matches nn.Linear shapes, transposed)."""
    ks = jax.random.split(key, 6)
    s = 0.2
    wphi = jax.random.normal(ks[0], (d, n), jnp.float32) * s        # Phi_1: Linear(d, n)
    bphi = jax.random.normal(ks[1], (1, n), jnp.float32) * s
    we = jax.random.normal(ks[2], (2, d, d), jnp.float32) * s       # 2 linear (1x1 conv) experts
    be = jax.random.normal(ks[3], (2, 1, d), jnp.float32) * s
    wsc = jax.random.normal(ks[4], (2, 1, d2), jnp.float32) * s     # face_scale / hand_scale: Linear(d2, 1)
    bsc = jax.random.normal(ks[5], (2, 1, 1), jnp.float32) * s
    return (wphi, bphi, we, be, wsc, bsc)


def _check(x, params, scales):
    y = jax.block_until_ready(soft_moe_layer(x, params, scales))
    y_ref = soft_moe_ref(x, params, scales)
    assert y.shape == x.shape
    err = jnp.max(jnp.abs(y - y_ref))
    # bf16 MXU operands with f32 accumulation / epilogue; global scores now f32.
    assert jnp.allclose(y, y_ref, atol=2e-2, rtol=2e-2), f"mismatch vs ref (max |err|={err})"


if __name__ == "__main__":
    # Conv-lora style 4D input (NCHW): B=2, d=4, H=W=16 -> m = 256 tokens.
    B, d, H, W = 2, 4, 16, 16
    n = 2                            # two experts -> Phi_1 out dim n = 2
    d2 = d                           # conv path: pooled features have dim d, so d2 == d
    scales = [0.8, 1.2]

    kx, kp = jax.random.split(jax.random.PRNGKey(0))
    x = jax.random.normal(kx, (B, d, H, W), jnp.float32)
    params = make_params(kp, d, n, d2)
    _check(x, params, scales)

    # Second shape exercising the token-padding path (m = 100 -> padded to 128).
    kx2, kp2 = jax.random.split(jax.random.PRNGKey(1))
    x2 = jax.random.normal(kx2, (1, 8, 10, 10), jnp.float32)
    params2 = make_params(kp2, 8, 2, 8)
    _check(x2, params2, [0.5, 1.5])

    # TODO(synk): the 3D (non-conv) path of SoftMoELayer.forward uses the same
    # token-space math; the wrapper here only exposes the 4D conv path.
    print("KERNEL_OK")
</pallas_src>

<mosaic_0001>
module attributes {stable_mosaic.version = 11 : i64} {
  func.func @_soft_moe_kernel(%arg0: i32, %arg1: i32, %arg2: memref<1x4x256xbf16, #tpu.memory_space<vmem>>, %arg3: memref<1x1x2xf32, #tpu.memory_space<vmem>>, %arg4: memref<16x4xbf16, #tpu.memory_space<vmem>>, %arg5: memref<16x1xf32, #tpu.memory_space<vmem>>, %arg6: memref<1x4x256xf32, #tpu.memory_space<vmem>>) attributes {dimension_semantics = [#tpu.dimension_semantics<parallel>, #tpu.dimension_semantics<parallel>], iteration_bounds = array<i64: 2, 1>, scalar_prefetch = 0 : i64, scratch_operands = 0 : i64, tpu.core_type = #tpu.core_type<tc>, window_params = [{transform_indices = @transform_0, window_bounds = array<i64: 1, 4, 256>}, {transform_indices = @transform_1, window_bounds = array<i64: 1, 1, 2>}, {pipeline_mode = #tpu.pipeline_mode<synchronous>, transform_indices = @transform_2, window_bounds = array<i64: 16, 4>}, {pipeline_mode = #tpu.pipeline_mode<synchronous>, transform_indices = @transform_3, window_bounds = array<i64: 16, 1>}, {transform_indices = @transform_4, window_bounds = array<i64: 1, 4, 256>}]} {
    %c0 = arith.constant 0 : index
    %c0_0 = arith.constant 0 : index
    %c0_1 = arith.constant 0 : index
    %0 = vector.load %arg2[%c0, %c0_0, %c0_1] : memref<1x4x256xbf16, #tpu.memory_space<vmem>>, vector<1x4x256xbf16>
    %1 = vector.shape_cast %0 : vector<1x4x256xbf16> to vector<4x256xbf16>
    %c0_2 = arith.constant 0 : index
    %c0_3 = arith.constant 0 : index
    %2 = vector.load %arg4[%c0_2, %c0_3] : memref<16x4xbf16, #tpu.memory_space<vmem>>, vector<16x4xbf16>
    %cst = arith.constant dense<0.000000e+00> : vector<16x256xf32>
    %3 = tpu.matmul %2, %1, %cst {dimension_numbers = #tpu.dot_dimension_numbers<[1], [0], [0], [1], [0, 0, 1, 1], [], []>} : vector<16x4xbf16>, vector<4x256xbf16>, vector<16x256xf32> -> vector<16x256xf32>
    %c0_4 = arith.constant 0 : index
    %c0_5 = arith.constant 0 : index
    %4 = vector.load %arg5[%c0_4, %c0_5] : memref<16x1xf32, #tpu.memory_space<vmem>>, vector<16x1xf32>
    %5 = vector.broadcast %4 : vector<16x1xf32> to vector<16x256xf32>
    %6 = arith.addf %3, %5 : vector<16x256xf32>
    %7 = vector.extract_strided_slice %6 {offsets = [0, 0], sizes = [4, 256], strides = [1, 1]} : vector<16x256xf32> to vector<4x256xf32>
    %8 = vector.extract_strided_slice %6 {offsets = [4, 0], sizes = [4, 256], strides = [1, 1]} : vector<16x256xf32> to vector<4x256xf32>
    %9 = vector.extract_strided_slice %6 {offsets = [8, 0], sizes = [2, 256], strides = [1, 1]} : vector<16x256xf32> to vector<2x256xf32>
    %10 = arith.negf %9 : vector<2x256xf32>
    %11 = math.exp %10 : vector<2x256xf32>
    %cst_6 = arith.constant 1.000000e+00 : f32
    %12 = vector.broadcast %cst_6 : f32 to vector<2x256xf32>
    %13 = arith.addf %12, %11 : vector<2x256xf32>
    %14 = arith.divf %12, %13 : vector<2x256xf32>
    %c0_7 = arith.constant 0 : index
    %c0_8 = arith.constant 0 : index
    %c0_9 = arith.constant 0 : index
    %15 = vector.load %arg3[%c0_7, %c0_8, %c0_9] : memref<1x1x2xf32, #tpu.memory_space<vmem>>, vector<1x1x2xf32>
    %16 = vector.shape_cast %15 : vector<1x1x2xf32> to vector<1x2xf32>
    %17 = vector.extract_strided_slice %14 {offsets = [0, 0], sizes = [1, 256], strides = [1, 1]} : vector<2x256xf32> to vector<1x256xf32>
    %18 = vector.extract_strided_slice %16 {offsets = [0, 0], sizes = [1, 1], strides = [1, 1]} : vector<1x2xf32> to vector<1x1xf32>
    %19 = vector.broadcast %18 : vector<1x1xf32> to vector<1x256xf32>
    %20 = arith.mulf %17, %19 : vector<1x256xf32>
    %21 = vector.broadcast %20 : vector<1x256xf32> to vector<4x256xf32>
    %22 = arith.mulf %7, %21 : vector<4x256xf32>
    %23 = vector.extract_strided_slice %14 {offsets = [1, 0], sizes = [1, 256], strides = [1, 1]} : vector<2x256xf32> to vector<1x256xf32>
    %24 = vector.extract_strided_slice %16 {offsets = [0, 1], sizes = [1, 1], strides = [1, 1]} : vector<1x2xf32> to vector<1x1xf32>
    %25 = vector.broadcast %24 : vector<1x1xf32> to vector<1x256xf32>
    %26 = arith.mulf %23, %25 : vector<1x256xf32>
    %27 = vector.broadcast %26 : vector<1x256xf32> to vector<4x256xf32>
    %28 = arith.mulf %8, %27 : vector<4x256xf32>
    %29 = arith.addf %22, %28 : vector<4x256xf32>
    %c0_10 = arith.constant 0 : index
    %c0_11 = arith.constant 0 : index
    %c0_12 = arith.constant 0 : index
    %30 = vector.load %arg6[%c0_10, %c0_11, %c0_12] : memref<1x4x256xf32, #tpu.memory_space<vmem>>, vector<1x4x256xf32>
    %31 = vector.shape_cast %30 : vector<1x4x256xf32> to vector<4x256xf32>
    %32 = vector.shape_cast %29 : vector<4x256xf32> to vector<1x4x256xf32>
    tpu.vector_store %arg6[%c0_10, %c0_11, %c0_12], %32 {strides = array<i32>} : memref<1x4x256xf32, #tpu.memory_space<vmem>>, vector<1x4x256xf32>,
    return
  }
  func.func @transform_0(%arg0: i32, %arg1: i32) -> (i32, i32, i32) {
    %c0_i32 = arith.constant 0 : i32
    %c0_i32_0 = arith.constant 0 : i32
    return %arg0, %c0_i32, %arg1 : i32, i32, i32
  }
  func.func @transform_1(%arg0: i32, %arg1: i32) -> (i32, i32, i32) {
    %c0_i32 = arith.constant 0 : i32
    %c0_i32_0 = arith.constant 0 : i32
    %c0_i32_1 = arith.constant 0 : i32
    return %arg0, %c0_i32, %c0_i32_0 : i32, i32, i32
  }
  func.func @transform_2(%arg0: i32, %arg1: i32) -> (i32, i32) {
    %c0_i32 = arith.constant 0 : i32
    %c0_i32_0 = arith.constant 0 : i32
    %c0_i32_1 = arith.constant 0 : i32
    return %c0_i32, %c0_i32_0 : i32, i32
  }
  func.func @transform_3(%arg0: i32, %arg1: i32) -> (i32, i32) {
    %c0_i32 = arith.constant 0 : i32
    %c0_i32_0 = arith.constant 0 : i32
    %c0_i32_1 = arith.constant 0 : i32
    return %c0_i32, %c0_i32_0 : i32, i32
  }
  func.func @transform_4(%arg0: i32, %arg1: i32) -> (i32, i32, i32) {
    %c0_i32 = arith.constant 0 : i32
    %c0_i32_0 = arith.constant 0 : i32
    return %arg0, %c0_i32, %arg1 : i32, i32, i32
  }
}

module attributes {stable_mosaic.version = 11 : i64} {
  func.func @_soft_moe_kernel(%arg0: i32, %arg1: i32, %arg2: memref<1x4x256xbf16, #tpu.memory_space<vmem>>, %arg3: memref<1x1x2xf32, #tpu.memory_space<vmem>>, %arg4: memref<16x4xbf16, #tpu.memory_space<vmem>>, %arg5: memref<16x1xf32, #tpu.memory_space<vmem>>, %arg6: memref<1x4x256xf32, #tpu.memory_space<vmem>>) attributes {dimension_semantics = [#tpu.dimension_semantics<parallel>, #tpu.dimension_semantics<parallel>], iteration_bounds = array<i64: 2, 1>, scalar_prefetch = 0 : i64, scratch_operands = 0 : i64, tpu.core_type = #tpu.core_type<tc>, window_params = [{transform_indices = @transform_0, window_bounds = array<i64: 1, 4, 256>}, {transform_indices = @transform_1, window_bounds = array<i64: 1, 1, 2>}, {pipeline_mode = #tpu.pipeline_mode<synchronous>, transform_indices = @transform_2, window_bounds = array<i64: 16, 4>}, {pipeline_mode = #tpu.pipeline_mode<synchronous>, transform_indices = @transform_3, window_bounds = array<i64: 16, 1>}, {transform_indices = @transform_4, window_bounds = array<i64: 1, 4, 256>}]} {
    %c0 = arith.constant 0 : index
    %c0_0 = arith.constant 0 : index
    %c0_1 = arith.constant 0 : index
    %0 = vector.load %arg2[%c0, %c0_0, %c0_1] : memref<1x4x256xbf16, #tpu.memory_space<vmem>>, vector<1x4x256xbf16>
    %1 = vector.shape_cast %0 : vector<1x4x256xbf16> to vector<4x256xbf16>
    %c0_2 = arith.constant 0 : index
    %c0_3 = arith.constant 0 : index
    %2 = vector.load %arg4[%c0_2, %c0_3] : memref<16x4xbf16, #tpu.memory_space<vmem>>, vector<16x4xbf16>
    %cst = arith.constant dense<0.000000e+00> : vector<16x256xf32>
    %3 = tpu.matmul %2, %1, %cst {dimension_numbers = #tpu.dot_dimension_numbers<[1], [0], [0], [1], [0, 0, 1, 1], [], []>} : vector<16x4xbf16>, vector<4x256xbf16>, vector<16x256xf32> -> vector<16x256xf32>
    %c0_4 = arith.constant 0 : index
    %c0_5 = arith.constant 0 : index
    %4 = vector.load %arg5[%c0_4, %c0_5] : memref<16x1xf32, #tpu.memory_space<vmem>>, vector<16x1xf32>
    %5 = vector.broadcast %4 : vector<16x1xf32> to vector<16x256xf32>
    %6 = arith.addf %3, %5 : vector<16x256xf32>
    %7 = vector.extract_strided_slice %6 {offsets = [0, 0], sizes = [4, 256], strides = [1, 1]} : vector<16x256xf32> to vector<4x256xf32>
    %8 = vector.extract_strided_slice %6 {offsets = [4, 0], sizes = [4, 256], strides = [1, 1]} : vector<16x256xf32> to vector<4x256xf32>
    %9 = vector.extract_strided_slice %6 {offsets = [8, 0], sizes = [2, 256], strides = [1, 1]} : vector<16x256xf32> to vector<2x256xf32>
    %10 = arith.negf %9 : vector<2x256xf32>
    %11 = math.exp %10 : vector<2x256xf32>
    %cst_6 = arith.constant 1.000000e+00 : f32
    %12 = vector.broadcast %cst_6 : f32 to vector<2x256xf32>
    %13 = arith.addf %12, %11 : vector<2x256xf32>
    %14 = arith.divf %12, %13 : vector<2x256xf32>
    %c0_7 = arith.constant 0 : index
    %c0_8 = arith.constant 0 : index
    %c0_9 = arith.constant 0 : index
    %15 = vector.load %arg3[%c0_7, %c0_8, %c0_9] : memref<1x1x2xf32, #tpu.memory_space<vmem>>, vector<1x1x2xf32>
    %16 = vector.shape_cast %15 : vector<1x1x2xf32> to vector<1x2xf32>
    %17 = vector.extract_strided_slice %14 {offsets = [0, 0], sizes = [1, 256], strides = [1, 1]} : vector<2x256xf32> to vector<1x256xf32>
    %18 = vector.extract_strided_slice %16 {offsets = [0, 0], sizes = [1, 1], strides = [1, 1]} : vector<1x2xf32> to vector<1x1xf32>
    %19 = vector.broadcast %18 : vector<1x1xf32> to vector<1x256xf32>
    %20 = arith.mulf %17, %19 : vector<1x256xf32>
    %21 = vector.broadcast %20 : vector<1x256xf32> to vector<4x256xf32>
    %22 = arith.mulf %7, %21 : vector<4x256xf32>
    %23 = vector.extract_strided_slice %14 {offsets = [1, 0], sizes = [1, 256], strides = [1, 1]} : vector<2x256xf32> to vector<1x256xf32>
    %24 = vector.extract_strided_slice %16 {offsets = [0, 1], sizes = [1, 1], strides = [1, 1]} : vector<1x2xf32> to vector<1x1xf32>
    %25 = vector.broadcast %24 : vector<1x1xf32> to vector<1x256xf32>
    %26 = arith.mulf %23, %25 : vector<1x256xf32>
    %27 = vector.broadcast %26 : vector<1x256xf32> to vector<4x256xf32>
    %28 = arith.mulf %8, %27 : vector<4x256xf32>
    %29 = arith.addf %22, %28 : vector<4x256xf32>
    %c0_10 = arith.constant 0 : index
    %c0_11 = arith.constant 0 : index
    %c0_12 = arith.constant 0 : index
    %30 = vector.load %arg6[%c0_10, %c0_11, %c0_12] : memref<1x4x256xf32, #tpu.memory_space<vmem>>, vector<1x4x256xf32>
    %31 = vector.shape_cast %30 : vector<1x4x256xf32> to vector<4x256xf32>
    %32 = vector.shape_cast %29 : vector<4x256xf32> to vector<1x4x256xf32>
    tpu.vector_store %arg6[%c0_10, %c0_11, %c0_12], %32 {strides = array<i32>} : memref<1x4x256xf32, #tpu.memory_space<vmem>>, vector<1x4x256xf32>,
    return
  }
  func.func @transform_0(%arg0: i32, %arg1: i32) -> (i32, i32, i32) {
    %c0_i32 = arith.constant 0 : i32
    %c0_i32_0 = arith.constant 0 : i32
    return %arg0, %c0_i32, %arg1 : i32, i32, i32
  }
  func.func @transform_1(%arg0: i32, %arg1: i32) -> (i32, i32, i32) {
    %c0_i32 = arith.constant 0 : i32
    %c0_i32_0 = arith.constant 0 : i32
    %c0_i32_1 = arith.constant 0 : i32
    return %arg0, %c0_i32, %c0_i32_0 : i32, i32, i32
  }
  func.func @transform_2(%arg0: i32, %arg1: i32) -> (i32, i32) {
    %c0_i32 = arith.constant 0 : i32
    %c0_i32_0 = arith.constant 0 : i32
    %c0_i32_1 = arith.constant 0 : i32
    return %c0_i32, %c0_i32_0 : i32, i32
  }
  func.func @transform_3(%arg0: i32, %arg1: i32) -> (i32, i32) {
    %c0_i32 = arith.constant 0 : i32
    %c0_i32_0 = arith.constant 0 : i32
    %c0_i32_1 = arith.constant 0 : i32
    return %c0_i32, %c0_i32_0 : i32, i32
  }
  func.func @transform_4(%arg0: i32, %arg1: i32) -> (i32, i32, i32) {
    %c0_i32 = arith.constant 0 : i32
    %c0_i32_0 = arith.constant 0 : i32
    return %arg0, %c0_i32, %arg1 : i32, i32, i32
  }
}

</mosaic_0001>

<llo_original>
// kernel: tpu_custom_call.1
$region0: #{tpu_custom_call.1}
  #allocation0 [shape = 'u32[]', space=smem, size = 0x4, offset = 0x4, fixed_abs, tag = 'smem constant byte address 0x4 - core index']
  #allocation1 [shape = 'u32[144,128]{1,0:T(1,128)}', space=vmem, size = 0x12000, scoped, tag = 'internal scratch']
  %s0 = inlined_call_operand.vmem [shape: bf16[2,4,256], index: 0, kind: input, shape index: {}]
  %s1 = inlined_call_operand.vmem [shape: f32[2,1,2], index: 1, kind: input, shape index: {}]
  %s2 = inlined_call_operand.vmem [shape: bf16[16,4], index: 2, kind: input, shape index: {}]
  %s3 = inlined_call_operand.vmem [shape: f32[16,1], index: 3, kind: input, shape index: {}]
  %s4 = inlined_call_operand.hbm [shape: f32[2,4,256], index: 4, kind: output, shape index: {}]
  %s5 = sld [smem:[#allocation0]]
  $region49: #{tpu_custom_call.1} parent=0
    _
  %s7 = ssub.s32 1, %s5
  %s8 = scalar_select 0, %s7, %s5
  $region1: #{tpu_custom_call.1} parent=0
    #allocation2 [shape = 'u8[8192]{0}', space=vmem, size = 0x2000, scoped, tag = 'output window, operand 0']
    #allocation3 [shape = 's32[2]{0}', space=sflag, size = 0x8, scoped, tag = 'scoped memory for tpu_custom_call.1']
    %9 = vsyncpa [#allocation3], 0
    %s10 = scalar_lea.sflag [#allocation3], 1
    %11 = vsyncpa %s10, 0
    loop: start=0, step=1, limit=4
    $region2: #{tpu_custom_call.1} parent=1 // loop_pre_header
      _
    $region3: #{tpu_custom_call.1} parent=1 // loop_header
      %s13 = sphi 0, %s17
      %p14 = scmp.ge.s32.totalorder %s13, 4
      %s20 = sphi 0, %s32
      %s21 = sphi 0, %s28
      %s22 = sphi 0, %s20
      %s23 = sphi 0, %s21
      %s24 = sphi 0, %s22
      %s25 = sphi 0, %s23
      %s37 = sphi 0, %s39
      %s40 = sphi 0, %s37
      %s41 = sphi 0, %s40
      %s57 = sphi 0, %s41
      %s63 = sphi 0, %s65
      %s66 = sphi 0, %s63
      %s67 = sphi 0, %s66
      %s83 = sphi 0, %s67
      %s87 = sphi 0, %s87
      %s89 = sphi 0, %s87
      %s90 = sphi 0, %s89
      %s104 = sphi 0, %s90
      %s108 = sphi 0, %s108
      %s110 = sphi 0, %s108
      %s111 = sphi 0, %s110
      %s125 = sphi 0, %s111
      %s133 = sphi 0, %s135
      %s136 = sphi 0, %s133
      %s137 = sphi 0, %s136
      %s153 = sphi 0, %s137
    $region4: #{tpu_custom_call.1} parent=1 // loop_header_branch
      %16 = sbr.rel (%p14) target = $region8
    $region5: #{tpu_custom_call.1} parent=1 // loop_body
      %s18 = ssub.s32 %s13, 1
      %s19 = ssub.s32 %s13, 2
      %s26 = sadd.s32 1, %s21
      %p27 = scmp.ge.s32.totalorder %s26, 1
      %s28 = scalar_select %p27, 0, %s26
      %s29 = sadd.s32 1, %s20
      %s30 = scalar_select %p27, %s29, %s20
      %p31 = scmp.ge.s32.totalorder %s30, 2
      %s32 = scalar_select %p31, 0, %s30
      %s33 = ssub.s32 %s20, %s32
      %s34 = ssub.s32 %s21, %s28
      %s35 = sor.u32 %s33, %s34
      %p36 = scmp.eq.s32.totalorder %s35, 0
      %s38 = sadd.s32 %s37, 1
      %s39 = scalar_select %p36, %s37, %s38
      %p42 = pneg %p36
      %p43 = scmp.eq.s32.totalorder %s13, 1
      %p44 = por %p42, %p43
      %p45 = scmp.ne.s32.totalorder %s37, %s40
      %p46 = scmp.eq.s32.totalorder %s13, 0
      %p47 = por %p45, %p46
      %p48 = scmp.ne.s32.totalorder %s37, %s40
      %p49 = scmp.eq.s32.totalorder %s18, 1
      %p50 = por %p48, %p49
      %p51 = scmp.ne.s32.totalorder %s40, %s41
      %p52 = scmp.eq.s32.totalorder %s18, 0
      %p53 = por %p51, %p52
      %p54 = scmp.ne.s32.totalorder %s40, %s41
      %p55 = scmp.eq.s32.totalorder %s19, 1
      %p56 = por %p54, %p55
      %p58 = scmp.ne.s32.totalorder %s41, %s57
      %p59 = scmp.eq.s32.totalorder %s19, 0
      %p60 = por %p58, %p59
      %s61 = ssub.s32 %s20, %s32
      %p62 = scmp.eq.s32.totalorder %s61, 0
      %s64 = sadd.s32 %s63, 1
      %s65 = scalar_select %p62, %s63, %s64
      %p68 = pneg %p62
      %p69 = scmp.eq.s32.totalorder %s13, 1
      %p70 = por %p68, %p69
      %p71 = scmp.ne.s32.totalorder %s63, %s66
      %p72 = scmp.eq.s32.totalorder %s13, 0
      %p73 = por %p71, %p72
      %p74 = scmp.ne.s32.totalorder %s63, %s66
      %p75 = scmp.eq.s32.totalorder %s18, 1
      %p76 = por %p74, %p75
      %p77 = scmp.ne.s32.totalorder %s66, %s67
      %p78 = scmp.eq.s32.totalorder %s18, 0
      %p79 = por %p77, %p78
      %p80 = scmp.ne.s32.totalorder %s66, %s67
      %p81 = scmp.eq.s32.totalorder %s19, 1
      %p82 = por %p80, %p81
      %p84 = scmp.ne.s32.totalorder %s67, %s83
      %p85 = scmp.eq.s32.totalorder %s19, 0
      %p86 = por %p84, %p85
      %s88 = sadd.s32 %s87, 1
      %p91 = scmp.eq.s32.totalorder %s13, 1
      %p92 = scmp.ne.s32.totalorder %s87, %s89
      %p93 = scmp.eq.s32.totalorder %s13, 0
      %p94 = por %p92, %p93
      %p95 = scmp.ne.s32.totalorder %s87, %s89
      %p96 = scmp.eq.s32.totalorder %s18, 1
      %p97 = por %p95, %p96
      %p98 = scmp.ne.s32.totalorder %s89, %s90
      %p99 = scmp.eq.s32.totalorder %s18, 0
      %p100 = por %p98, %p99
      %p101 = scmp.ne.s32.totalorder %s89, %s90
      %p102 = scmp.eq.s32.totalorder %s19, 1
      %p103 = por %p101, %p102
      %p105 = scmp.ne.s32.totalorder %s90, %s104
      %p106 = scmp.eq.s32.totalorder %s19, 0
      %p107 = por %p105, %p106
      %s109 = sadd.s32 %s108, 1
      %p112 = scmp.eq.s32.totalorder %s13, 1
      %p113 = scmp.ne.s32.totalorder %s108, %s110
      %p114 = scmp.eq.s32.totalorder %s13, 0
      %p115 = por %p113, %p114
      %p116 = scmp.ne.s32.totalorder %s108, %s110
      %p117 = scmp.eq.s32.totalorder %s18, 1
      %p118 = por %p116, %p117
      %p119 = scmp.ne.s32.totalorder %s110, %s111
      %p120 = scmp.eq.s32.totalorder %s18, 0
      %p121 = por %p119, %p120
      %p122 = scmp.ne.s32.totalorder %s110, %s111
      %p123 = scmp.eq.s32.totalorder %s19, 1
      %p124 = por %p122, %p123
      %p126 = scmp.ne.s32.totalorder %s111, %s125
      %p127 = scmp.eq.s32.totalorder %s19, 0
      %p128 = por %p126, %p127
      %s129 = ssub.s32 %s20, %s32
      %s130 = ssub.s32 %s21, %s28
      %s131 = sor.u32 %s129, %s130
      %p132 = scmp.eq.s32.totalorder %s131, 0
      %s134 = sadd.s32 %s133, 1
      %s135 = scalar_select %p132, %s133, %s134
      %p138 = pneg %p132
      %p139 = scmp.eq.s32.totalorder %s13, 1
      %p140 = por %p138, %p139
      %p141 = scmp.ne.s32.totalorder %s133, %s136
      %p142 = scmp.eq.s32.totalorder %s13, 0
      %p143 = por %p141, %p142
      %p144 = scmp.ne.s32.totalorder %s133, %s136
      %p145 = scmp.eq.s32.totalorder %s18, 1
      %p146 = por %p144, %p145
      %p147 = scmp.ne.s32.totalorder %s136, %s137
      %p148 = scmp.eq.s32.totalorder %s18, 0
      %p149 = por %p147, %p148
      %p150 = scmp.ne.s32.totalorder %s136, %s137
      %p151 = scmp.eq.s32.totalorder %s19, 1
      %p152 = por %p150, %p151
      %p154 = scmp.ne.s32.totalorder %s137, %s153
      %p155 = scmp.eq.s32.totalorder %s19, 0
      %p156 = por %p154, %p155
      %p157 = scmp.le.s32.totalorder 1, %s13
      %p158 = scmp.lt.s32.totalorder %s13, 3
      %p159 = pnand %p157, %p158
      %p160 = pneg %p159
      // Predicated region
      $region9: #{tpu_custom_call.1} parent=5 // pred_check
        _
      $region10: #{tpu_custom_call.1} parent=5 // pred_check_branch
        %162 = sbr.rel (%p159) target = $region12
      $region11: #{tpu_custom_call.1} parent=5 // pred_region
        %s163 = ssub.s32 %s13, 1
        // Predicated region
        $region13: #{tpu_custom_call.1} parent=11 // pred_check
          %p164 = pneg %p100
        $region14: #{tpu_custom_call.1} parent=11 // pred_check_branch
          %166 = sbr.rel (%p164) target = $region16
        $region15: #{tpu_custom_call.1} parent=11 // pred_region
          _
        $region16: #{tpu_custom_call.1} parent=11 // pred_fallthru
          _
        // Predicated region
        $region17: #{tpu_custom_call.1} parent=11 // pred_check
          %p167 = pneg %p121
        $region18: #{tpu_custom_call.1} parent=11 // pred_check_branch
          %169 = sbr.rel (%p167) target = $region20
        $region19: #{tpu_custom_call.1} parent=11 // pred_region
          _
        $region20: #{tpu_custom_call.1} parent=11 // pred_fallthru
          _
      $region12: #{tpu_custom_call.1} parent=5 // pred_fallthru
        _
      %p170 = scmp.lt.s32.totalorder %s13, 2
      // Predicated region
      $region21: #{tpu_custom_call.1} parent=5 // pred_check
        %p171 = pneg %p170
      $region22: #{tpu_custom_call.1} parent=5 // pred_check_branch
        %173 = sbr.rel (%p171) target = $region24
      $region23: #{tpu_custom_call.1} parent=5 // pred_region
        // Predicated region
        $region25: #{tpu_custom_call.1} parent=23 // pred_check
          %p174 = pneg %p47
        $region26: #{tpu_custom_call.1} parent=23 // pred_check_branch
          %176 = sbr.rel (%p174) target = $region28
        $region27: #{tpu_custom_call.1} parent=23 // pred_region
          %s177 = smul.u32 2, %s21
          %p178 = scmp.lt.s32.totalorder %s20, 1
          %s179 = scalar_select %p178, %s20, 1
          %p180 = scmp.lt.s32.totalorder %s177, 1
          %s181 = scalar_select %p180, %s177, 1
          %s182 = smul.addr %s179, 2
          %s183 = sadd.s32 %s181, %s182
          %s184 = smul.addr %s183, 2
          %s185 = scalar_lea.vmem %s0, %s184
          %s186 = smul.u32 2, %s21
        $region28: #{tpu_custom_call.1} parent=23 // pred_fallthru
          _
        // Predicated region
        $region29: #{tpu_custom_call.1} parent=23 // pred_check
          %p187 = pneg %p73
        $region30: #{tpu_custom_call.1} parent=23 // pred_check_branch
          %189 = sbr.rel (%p187) target = $region32
        $region31: #{tpu_custom_call.1} parent=23 // pred_region
          %p190 = scmp.lt.s32.totalorder %s20, 1
          %s191 = scalar_select %p190, %s20, 1
          %s192 = scalar_lea.vmem %s1, %s191
        $region32: #{tpu_custom_call.1} parent=23 // pred_fallthru
          _
      $region24: #{tpu_custom_call.1} parent=5 // pred_fallthru
        _
      %p193 = scmp.le.s32.totalorder 1, %s13
      %p194 = scmp.lt.s32.totalorder %s13, 3
      %p195 = pnand %p193, %p194
      %p196 = pneg %p195
      // Predicated region
      $region33: #{tpu_custom_call.1} parent=5 // pred_check
        _
      $region34: #{tpu_custom_call.1} parent=5 // pred_check_branch
        %198 = sbr.rel (%p195) target = $region36
      $region35: #{tpu_custom_call.1} parent=5 // pred_region
        %s199 = ssub.s32 %s13, 1
        %s200 = smul.u32 2, %s23
        %p201 = scmp.lt.s32.totalorder %s22, 1
        %s202 = scalar_select %p201, %s22, 1
        %p203 = scmp.lt.s32.totalorder %s200, 1
        %s204 = scalar_select %p203, %s200, 1
        %s205 = smul.addr %s202, 2
        %s206 = sadd.s32 %s204, %s205
        %s207 = smul.addr %s206, 2
        %s208 = scalar_lea.vmem %s0, %s207
        %p209 = pneg %p53
        %p210 = pneg %p50
        %p211 = scmp.lt.s32.totalorder %s22, 1
        %s212 = scalar_select %p211, %s22, 1
        %s213 = scalar_lea.vmem %s1, %s212
        %p214 = pneg %p79
        %p215 = pneg %p76
        %p216 = pneg %p100
        %p217 = pneg %p97
        %p218 = pneg %p121
        %p219 = pneg %p118
        %p220 = pneg %p149
        %p221 = pneg %p146
        %s222 = sand.u32 %s136, 1
        %s223 = scalar_lea.sflag [#allocation3], %s222
        %s224 = sand.u32 %s136, 1
        %s225 = smul.addr %s224, 8
        %s226 = scalar_lea.vmem [#allocation2], %s225
        %s227 = smul.u32 2, %s23
        %p228 = scmp.lt.s32.totalorder %s22, 1
        %s229 = scalar_select %p228, %s22, 1
        %p230 = scmp.lt.s32.totalorder %s227, 1
        %s231 = scalar_select %p230, %s227, 1
        %s232 = smul.addr %s229, 2
        %s233 = sadd.s32 %s231, %s232
        %s234 = smul.addr %s233, 2
        %s235 = scalar_lea.vmem %s0, %s234
        %s236 = smul.u32 2, %s23
        %p237 = scmp.lt.s32.totalorder %s22, 1
        %s238 = scalar_select %p237, %s22, 1
        %s239 = scalar_lea.vmem %s1, %s238
        %s240 = smul.u32 2, %s23
        %v242 = vld [vmem:[%s235] sm:$0xf]
        %v243 = vld [vmem:[%s2] sm:$0xf]
        %v244 = vld [vmem:[%s2 + $0x4] sm:$0xf]
        %v245 = vld [vmem:[%s3] sm:$0xff]
        %v246 = vld [vmem:[%s3 + $0x8] sm:$0xff]
        %248 = vset.pattern.permute.xlu0 0
        %249 = vperm.xlu0 %248, %v245
        %v250 = vpop.permute.xlu0 %249
        %253 = vset.pattern.permute.xlu0 0
        %254 = vperm.xlu0 %253, %v246
        %v255 = vpop.permute.xlu0 %254
        %v259 = vunpack.c.l.b16 %v243
        %v260 = vunpack.c.l.b16 %v244
        %v261 = vpack.c.b16 %v260, %v259
        %v264 = vunpack.c.l.s4 1983009808
        %v265 = vunpack.c.0.s8 %v264
        %v266 = vlaneseq
        %v267 = vshrl.u32 %v266, 7
        %v268 = vsub.s32 %v265, %v267
        %v269 = vrot.slane %v242, %v268
        %v270 = vcombine.high %v269, %v269
        %vm271 = vcmask 31744
        %v273 = vsel %vm271, %v261, 0
        %vm275 = vcmask 1041408
        %v277 = vsel %vm275, %v269, 0
        %v280 = vsel %vm275, %v270, 0
        %282 = vmatprep.subr.bf16.mxu0 0
        %283 = vmatpush1.bf16.msra.mxu0 0
        %284 = vmatprep.subr.bf16.mxu0 0
        %285 = vmatpush1.bf16.msra.mxu0 0
        %286 = vmatprep.subr.bf16.mxu0 0
        %287 = vmatpush1.bf16.msra.mxu0 0
        %288 = vmatprep.subr.bf16.mxu0 0
        %289 = vmatpush1.bf16.msra.mxu0 0
        %290 = vmatprep.subr.bf16.mxu0 0
        %291 = vmatpush1.bf16.msra.mxu0 0
        %292 = vmatprep.subr.bf16.mxu0 0
        %293 = vmatpush1.bf16.msra.mxu0 0
        %294 = vmatprep.subr.bf16.mxu0 0
        %295 = vmatpush1.bf16.msra.mxu0 0
        %296 = vmatprep.subr.bf16.mxu0 %v280
        %297 = vmatpush1.bf16.msra.mxu0 %v277
        %298 = vmatprep.subr.bf16.mxu0 0
        %299 = vmatpush2.bf16.msra.mxu0 0
        %300 = vmatprep.subr.bf16.mxu0 0
        %301 = vmatpush2.bf16.msra.mxu0 0
        %302 = vmatprep.subr.bf16.mxu0 0
        %303 = vmatpush2.bf16.msra.mxu0 0
        %304 = vmatprep.subr.bf16.mxu0 0
        %305 = vmatpush2.bf16.msra.mxu0 0
        %306 = vmatprep.subr.bf16.mxu0 0
        %307 = vmatpush2.bf16.msra.mxu0 0
        %308 = vmatprep.subr.bf16.mxu0 0
        %309 = vmatpush2.bf16.msra.mxu0 0
        %310 = vmatprep.subr.bf16.mxu0 0
        %311 = vmatpush2.bf16.msra.mxu0 0
        %312 = vmatprep.subr.bf16.mxu0 0
        %313 = vmatpush2.bf16.msra.mxu0 0
        %314 = vmatprep.mubr.bf16.mxu0 0
        %315 = vmatmul.mubr.bf16.gmra.mxu0 %v273
        %v316 = vpop.f32.mrf.mxu0
        %v317 = vadd.f32 %v250, %v316
        %v318 = vpop.f32.mrf.mxu0
        %v319 = vadd.f32 %v250, %v318
        %v320 = vpop.f32.mrf.mxu0
        %v321 = vadd.f32 %v255, %v320
        %v322 = vpop.f32.mrf.mxu0
        %v323 = vadd.f32 %v255, %v322
        %324 = vdwg.mxu0
        %v325 = vxor.u32 %v321, 2147483648
        %v326 = vxor.u32 %v323, 2147483648
        %v327 = vmul.f32 %v325, 1.442695
        %v328 = vpow.pop %v327
        %v329 = vmul.f32 %v326, 1.442695
        %v330 = vpow.pop %v329
        %v331 = vadd.f32 %v328, 1.0
        %v332 = vadd.f32 %v330, 1.0
        %v333 = vrcp.pop %v331
        %v334 = vmul.f32 1.0, %v333
        %v335 = vrcp.pop %v332
        %v336 = vmul.f32 1.0, %v335
        %v337 = vld [vmem:[%s239] sm:$0x1]
        %339 = vset.pattern.permute.xlu0 0
        %340 = vperm.xlu0 %339, %v337
        %v341 = vpop.permute.xlu0 %340
        %v343 = vlaneseq
        %v344 = vshrl.u32 %v343, 7
        %v345 = vsub.s32 0, %v344
        %v346 = vrot.slane %v341, %v345
        %v347 = vmul.f32 %v334, %v346
        %v348 = vmul.f32 %v336, %v346
        %v349 = vlaneseq
        %v350 = vshrl.u32 %v349, 7
        %v351 = vsub.s32 0, %v350
        %v352 = vrot.slane %v347, %v351
        %v353 = vlaneseq
        %v354 = vshrl.u32 %v353, 7
        %v355 = vsub.s32 0, %v354
        %v356 = vrot.slane %v348, %v355
        %v357 = vmul.f32 %v317, %v352
        %v358 = vmul.f32 %v319, %v356
        %359 = vset.pattern.permute.xlu0 1
        %360 = vperm.xlu0 %359, %v337
        %v361 = vpop.permute.xlu0 %360
        %v363 = vlaneseq
        %v364 = vshrl.u32 %v363, 7
        %v365 = vsub.s32 0, %v364
        %v366 = vrot.slane %v361, %v365
        %v367 = vmul.f32 %v334, %v366
        %v368 = vmul.f32 %v336, %v366
        %v369 = vlaneseq
        %v370 = vshrl.u32 %v369, 7
        %v371 = vsub.s32 1, %v370
        %v372 = vrot.slane %v367, %v371
        %v373 = vlaneseq
        %v374 = vshrl.u32 %v373, 7
        %v375 = vsub.s32 1, %v374
        %v376 = vrot.slane %v368, %v375
        %v377 = vmul.f32 %v317, %v372
        %v378 = vmul.f32 %v319, %v376
        %v381 = vrot.slane %v377, 4
        %v382 = vrot.slane %v378, 4
        %v385 = vadd.f32 %v357, %v381
        %v386 = vadd.f32 %v358, %v382
        %v389 = vcombine.low %v385, %v386
        %391 = vst [vmem:[%s226] sm:$0xff] %v389
        %s392 = sand.u32 %s136, 1
        %s393 = scalar_lea.sflag [#allocation3], %s392
        %s394 = sand.u32 %s136, 1
        %s395 = smul.addr %s394, 8
        %s396 = scalar_lea.vmem [#allocation2], %s395
        // Predicated region
        $region37: #{tpu_custom_call.1} parent=35 // pred_check
          %p397 = pneg %p146
        $region38: #{tpu_custom_call.1} parent=35 // pred_check_branch
          %399 = sbr.rel (%p397) target = $region40
        $region39: #{tpu_custom_call.1} parent=35 // pred_region
          %s400 = smul.u32 2, %s23
          %s402 = ssub.s32 128, 128
          %403 = vsyncadd %s393, %s402
          %s404 = smul.addr %s22, 2
          %s405 = sadd.s32 %s400, %s404
          %s406 = smul.addr %s405, 64
          %s407 = scalar_lea.hbm %s4, %s406
          %s409 = sshll.u32 %s396, 4
          %s410 = int_to_ptr.vmem [resolvable:$true] %s409
          %412 = dma.vmem_to_hbm [thread:$0]  %s410, 128, %s407, %s393
        $region40: #{tpu_custom_call.1} parent=35 // pred_fallthru
          _
      $region36: #{tpu_custom_call.1} parent=5 // pred_fallthru
        _
      %p413 = scmp.le.s32.totalorder 2, %s13
      // Predicated region
      $region41: #{tpu_custom_call.1} parent=5 // pred_check
        %p414 = pneg %p413
      $region42: #{tpu_custom_call.1} parent=5 // pred_check_branch
        %416 = sbr.rel (%p414) target = $region44
      $region43: #{tpu_custom_call.1} parent=5 // pred_region
        %s417 = ssub.s32 %s13, 2
        // Predicated region
        $region45: #{tpu_custom_call.1} parent=43 // pred_check
          %p418 = pneg %p152
        $region46: #{tpu_custom_call.1} parent=43 // pred_check_branch
          %420 = sbr.rel (%p418) target = $region48
        $region47: #{tpu_custom_call.1} parent=43 // pred_region
          %s421 = sand.u32 %s137, 1
          %s422 = scalar_lea.sflag [#allocation3], %s421
          %s423 = sand.u32 %s137, 1
          %s424 = smul.addr %s423, 8
          %s425 = scalar_lea.vmem [#allocation2], %s424
          %426 = dma.done %s422, 128
        $region48: #{tpu_custom_call.1} parent=43 // pred_fallthru
          _
      $region44: #{tpu_custom_call.1} parent=5 // pred_fallthru
        _
    $region6: #{tpu_custom_call.1} parent=1 // loop_footer
      %s17 = sadd.s32 1, %s13
    $region7: #{tpu_custom_call.1} parent=1 // loop_footer_branch
      %12 = sbr.rel target = $region3
    $region8: #{tpu_custom_call.1} parent=1 // loop_exit
      _
    %427 = vsyncpa [#allocation3], 1
    %s428 = scalar_lea.sflag [#allocation3], 1
    %429 = vsyncpa %s428, 1

// kernel: tpu_custom_call.1
$region0: #{tpu_custom_call.1}
  #allocation0 [shape = 'u32[]', space=smem, size = 0x4, offset = 0x4, fixed_abs, tag = 'smem constant byte address 0x4 - core index']
  #allocation1 [shape = 'u32[144,128]{1,0:T(1,128)}', space=vmem, size = 0x12000, scoped, tag = 'internal scratch']
  %s0 = inlined_call_operand.vmem [shape: bf16[2,4,256], index: 0, kind: input, shape index: {}]
  %s1 = inlined_call_operand.vmem [shape: f32[2,1,2], index: 1, kind: input, shape index: {}]
  %s2 = inlined_call_operand.vmem [shape: bf16[16,4], index: 2, kind: input, shape index: {}]
  %s3 = inlined_call_operand.vmem [shape: f32[16,1], index: 3, kind: input, shape index: {}]
  %s4 = inlined_call_operand.hbm [shape: f32[2,4,256], index: 4, kind: output, shape index: {}]
  %s5 = sld [smem:[#allocation0]]
  $region49: #{tpu_custom_call.1} parent=0
    _
  %s7 = ssub.s32 1, %s5
  %s8 = scalar_select 0, %s7, %s5
  $region1: #{tpu_custom_call.1} parent=0
    #allocation2 [shape = 'u8[8192]{0}', space=vmem, size = 0x2000, scoped, tag = 'output window, operand 0']
    #allocation3 [shape = 's32[2]{0}', space=sflag, size = 0x8, scoped, tag = 'scoped memory for tpu_custom_call.1']
    %9 = vsyncpa [#allocation3], 0
    %s10 = scalar_lea.sflag [#allocation3], 1
    %11 = vsyncpa %s10, 0
    loop: start=0, step=1, limit=4
    $region2: #{tpu_custom_call.1} parent=1 // loop_pre_header
      _
    $region3: #{tpu_custom_call.1} parent=1 // loop_header
      %s13 = sphi 0, %s17
      %p14 = scmp.ge.s32.totalorder %s13, 4
      %s20 = sphi 0, %s32
      %s21 = sphi 0, %s28
      %s22 = sphi 0, %s20
      %s23 = sphi 0, %s21
      %s24 = sphi 0, %s22
      %s25 = sphi 0, %s23
      %s37 = sphi 0, %s39
      %s40 = sphi 0, %s37
      %s41 = sphi 0, %s40
      %s57 = sphi 0, %s41
      %s63 = sphi 0, %s65
      %s66 = sphi 0, %s63
      %s67 = sphi 0, %s66
      %s83 = sphi 0, %s67
      %s87 = sphi 0, %s87
      %s89 = sphi 0, %s87
      %s90 = sphi 0, %s89
      %s104 = sphi 0, %s90
      %s108 = sphi 0, %s108
      %s110 = sphi 0, %s108
      %s111 = sphi 0, %s110
      %s125 = sphi 0, %s111
      %s133 = sphi 0, %s135
      %s136 = sphi 0, %s133
      %s137 = sphi 0, %s136
      %s153 = sphi 0, %s137
    $region4: #{tpu_custom_call.1} parent=1 // loop_header_branch
      %16 = sbr.rel (%p14) target = $region8
    $region5: #{tpu_custom_call.1} parent=1 // loop_body
      %s18 = ssub.s32 %s13, 1
      %s19 = ssub.s32 %s13, 2
      %s26 = sadd.s32 1, %s21
      %p27 = scmp.ge.s32.totalorder %s26, 1
      %s28 = scalar_select %p27, 0, %s26
      %s29 = sadd.s32 1, %s20
      %s30 = scalar_select %p27, %s29, %s20
      %p31 = scmp.ge.s32.totalorder %s30, 2
      %s32 = scalar_select %p31, 0, %s30
      %s33 = ssub.s32 %s20, %s32
      %s34 = ssub.s32 %s21, %s28
      %s35 = sor.u32 %s33, %s34
      %p36 = scmp.eq.s32.totalorder %s35, 0
      %s38 = sadd.s32 %s37, 1
      %s39 = scalar_select %p36, %s37, %s38
      %p42 = pneg %p36
      %p43 = scmp.eq.s32.totalorder %s13, 1
      %p44 = por %p42, %p43
      %p45 = scmp.ne.s32.totalorder %s37, %s40
      %p46 = scmp.eq.s32.totalorder %s13, 0
      %p47 = por %p45, %p46
      %p48 = scmp.ne.s32.totalorder %s37, %s40
      %p49 = scmp.eq.s32.totalorder %s18, 1
      %p50 = por %p48, %p49
      %p51 = scmp.ne.s32.totalorder %s40, %s41
      %p52 = scmp.eq.s32.totalorder %s18, 0
      %p53 = por %p51, %p52
      %p54 = scmp.ne.s32.totalorder %s40, %s41
      %p55 = scmp.eq.s32.totalorder %s19, 1
      %p56 = por %p54, %p55
      %p58 = scmp.ne.s32.totalorder %s41, %s57
      %p59 = scmp.eq.s32.totalorder %s19, 0
      %p60 = por %p58, %p59
      %s61 = ssub.s32 %s20, %s32
      %p62 = scmp.eq.s32.totalorder %s61, 0
      %s64 = sadd.s32 %s63, 1
      %s65 = scalar_select %p62, %s63, %s64
      %p68 = pneg %p62
      %p69 = scmp.eq.s32.totalorder %s13, 1
      %p70 = por %p68, %p69
      %p71 = scmp.ne.s32.totalorder %s63, %s66
      %p72 = scmp.eq.s32.totalorder %s13, 0
      %p73 = por %p71, %p72
      %p74 = scmp.ne.s32.totalorder %s63, %s66
      %p75 = scmp.eq.s32.totalorder %s18, 1
      %p76 = por %p74, %p75
      %p77 = scmp.ne.s32.totalorder %s66, %s67
      %p78 = scmp.eq.s32.totalorder %s18, 0
      %p79 = por %p77, %p78
      %p80 = scmp.ne.s32.totalorder %s66, %s67
      %p81 = scmp.eq.s32.totalorder %s19, 1
      %p82 = por %p80, %p81
      %p84 = scmp.ne.s32.totalorder %s67, %s83
      %p85 = scmp.eq.s32.totalorder %s19, 0
      %p86 = por %p84, %p85
      %s88 = sadd.s32 %s87, 1
      %p91 = scmp.eq.s32.totalorder %s13, 1
      %p92 = scmp.ne.s32.totalorder %s87, %s89
      %p93 = scmp.eq.s32.totalorder %s13, 0
      %p94 = por %p92, %p93
      %p95 = scmp.ne.s32.totalorder %s87, %s89
      %p96 = scmp.eq.s32.totalorder %s18, 1
      %p97 = por %p95, %p96
      %p98 = scmp.ne.s32.totalorder %s89, %s90
      %p99 = scmp.eq.s32.totalorder %s18, 0
      %p100 = por %p98, %p99
      %p101 = scmp.ne.s32.totalorder %s89, %s90
      %p102 = scmp.eq.s32.totalorder %s19, 1
      %p103 = por %p101, %p102
      %p105 = scmp.ne.s32.totalorder %s90, %s104
      %p106 = scmp.eq.s32.totalorder %s19, 0
      %p107 = por %p105, %p106
      %s109 = sadd.s32 %s108, 1
      %p112 = scmp.eq.s32.totalorder %s13, 1
      %p113 = scmp.ne.s32.totalorder %s108, %s110
      %p114 = scmp.eq.s32.totalorder %s13, 0
      %p115 = por %p113, %p114
      %p116 = scmp.ne.s32.totalorder %s108, %s110
      %p117 = scmp.eq.s32.totalorder %s18, 1
      %p118 = por %p116, %p117
      %p119 = scmp.ne.s32.totalorder %s110, %s111
      %p120 = scmp.eq.s32.totalorder %s18, 0
      %p121 = por %p119, %p120
      %p122 = scmp.ne.s32.totalorder %s110, %s111
      %p123 = scmp.eq.s32.totalorder %s19, 1
      %p124 = por %p122, %p123
      %p126 = scmp.ne.s32.totalorder %s111, %s125
      %p127 = scmp.eq.s32.totalorder %s19, 0
      %p128 = por %p126, %p127
      %s129 = ssub.s32 %s20, %s32
      %s130 = ssub.s32 %s21, %s28
      %s131 = sor.u32 %s129, %s130
      %p132 = scmp.eq.s32.totalorder %s131, 0
      %s134 = sadd.s32 %s133, 1
      %s135 = scalar_select %p132, %s133, %s134
      %p138 = pneg %p132
      %p139 = scmp.eq.s32.totalorder %s13, 1
      %p140 = por %p138, %p139
      %p141 = scmp.ne.s32.totalorder %s133, %s136
      %p142 = scmp.eq.s32.totalorder %s13, 0
      %p143 = por %p141, %p142
      %p144 = scmp.ne.s32.totalorder %s133, %s136
      %p145 = scmp.eq.s32.totalorder %s18, 1
      %p146 = por %p144, %p145
      %p147 = scmp.ne.s32.totalorder %s136, %s137
      %p148 = scmp.eq.s32.totalorder %s18, 0
      %p149 = por %p147, %p148
      %p150 = scmp.ne.s32.totalorder %s136, %s137
      %p151 = scmp.eq.s32.totalorder %s19, 1
      %p152 = por %p150, %p151
      %p154 = scmp.ne.s32.totalorder %s137, %s153
      %p155 = scmp.eq.s32.totalorder %s19, 0
      %p156 = por %p154, %p155
      %p157 = scmp.le.s32.totalorder 1, %s13
      %p158 = scmp.lt.s32.totalorder %s13, 3
      %p159 = pnand %p157, %p158
      %p160 = pneg %p159
      // Predicated region
      $region9: #{tpu_custom_call.1} parent=5 // pred_check
        _
      $region10: #{tpu_custom_call.1} parent=5 // pred_check_branch
        %162 = sbr.rel (%p159) target = $region12
      $region11: #{tpu_custom_call.1} parent=5 // pred_region
        %s163 = ssub.s32 %s13, 1
        // Predicated region
        $region13: #{tpu_custom_call.1} parent=11 // pred_check
          %p164 = pneg %p100
        $region14: #{tpu_custom_call.1} parent=11 // pred_check_branch
          %166 = sbr.rel (%p164) target = $region16
        $region15: #{tpu_custom_call.1} parent=11 // pred_region
          _
        $region16: #{tpu_custom_call.1} parent=11 // pred_fallthru
          _
        // Predicated region
        $region17: #{tpu_custom_call.1} parent=11 // pred_check
          %p167 = pneg %p121
        $region18: #{tpu_custom_call.1} parent=11 // pred_check_branch
          %169 = sbr.rel (%p167) target = $region20
        $region19: #{tpu_custom_call.1} parent=11 // pred_region
          _
        $region20: #{tpu_custom_call.1} parent=11 // pred_fallthru
          _
      $region12: #{tpu_custom_call.1} parent=5 // pred_fallthru
        _
      %p170 = scmp.lt.s32.totalorder %s13, 2
      // Predicated region
      $region21: #{tpu_custom_call.1} parent=5 // pred_check
        %p171 = pneg %p170
      $region22: #{tpu_custom_call.1} parent=5 // pred_check_branch
        %173 = sbr.rel (%p171) target = $region24
      $region23: #{tpu_custom_call.1} parent=5 // pred_region
        // Predicated region
        $region25: #{tpu_custom_call.1} parent=23 // pred_check
          %p174 = pneg %p47
        $region26: #{tpu_custom_call.1} parent=23 // pred_check_branch
          %176 = sbr.rel (%p174) target = $region28
        $region27: #{tpu_custom_call.1} parent=23 // pred_region
          %s177 = smul.u32 2, %s21
          %p178 = scmp.lt.s32.totalorder %s20, 1
          %s179 = scalar_select %p178, %s20, 1
          %p180 = scmp.lt.s32.totalorder %s177, 1
          %s181 = scalar_select %p180, %s177, 1
          %s182 = smul.addr %s179, 2
          %s183 = sadd.s32 %s181, %s182
          %s184 = smul.addr %s183, 2
          %s185 = scalar_lea.vmem %s0, %s184
          %s186 = smul.u32 2, %s21
        $region28: #{tpu_custom_call.1} parent=23 // pred_fallthru
          _
        // Predicated region
        $region29: #{tpu_custom_call.1} parent=23 // pred_check
          %p187 = pneg %p73
        $region30: #{tpu_custom_call.1} parent=23 // pred_check_branch
          %189 = sbr.rel (%p187) target = $region32
        $region31: #{tpu_custom_call.1} parent=23 // pred_region
          %p190 = scmp.lt.s32.totalorder %s20, 1
          %s191 = scalar_select %p190, %s20, 1
          %s192 = scalar_lea.vmem %s1, %s191
        $region32: #{tpu_custom_call.1} parent=23 // pred_fallthru
          _
      $region24: #{tpu_custom_call.1} parent=5 // pred_fallthru
        _
      %p193 = scmp.le.s32.totalorder 1, %s13
      %p194 = scmp.lt.s32.totalorder %s13, 3
      %p195 = pnand %p193, %p194
      %p196 = pneg %p195
      // Predicated region
      $region33: #{tpu_custom_call.1} parent=5 // pred_check
        _
      $region34: #{tpu_custom_call.1} parent=5 // pred_check_branch
        %198 = sbr.rel (%p195) target = $region36
      $region35: #{tpu_custom_call.1} parent=5 // pred_region
        %s199 = ssub.s32 %s13, 1
        %s200 = smul.u32 2, %s23
        %p201 = scmp.lt.s32.totalorder %s22, 1
        %s202 = scalar_select %p201, %s22, 1
        %p203 = scmp.lt.s32.totalorder %s200, 1
        %s204 = scalar_select %p203, %s200, 1
        %s205 = smul.addr %s202, 2
        %s206 = sadd.s32 %s204, %s205
        %s207 = smul.addr %s206, 2
        %s208 = scalar_lea.vmem %s0, %s207
        %p209 = pneg %p53
        %p210 = pneg %p50
        %p211 = scmp.lt.s32.totalorder %s22, 1
        %s212 = scalar_select %p211, %s22, 1
        %s213 = scalar_lea.vmem %s1, %s212
        %p214 = pneg %p79
        %p215 = pneg %p76
        %p216 = pneg %p100
        %p217 = pneg %p97
        %p218 = pneg %p121
        %p219 = pneg %p118
        %p220 = pneg %p149
        %p221 = pneg %p146
        %s222 = sand.u32 %s136, 1
        %s223 = scalar_lea.sflag [#allocation3], %s222
        %s224 = sand.u32 %s136, 1
        %s225 = smul.addr %s224, 8
        %s226 = scalar_lea.vmem [#allocation2], %s225
        %s227 = smul.u32 2, %s23
        %p228 = scmp.lt.s32.totalorder %s22, 1
        %s229 = scalar_select %p228, %s22, 1
        %p230 = scmp.lt.s32.totalorder %s227, 1
        %s231 = scalar_select %p230, %s227, 1
        %s232 = smul.addr %s229, 2
        %s233 = sadd.s32 %s231, %s232
        %s234 = smul.addr %s233, 2
        %s235 = scalar_lea.vmem %s0, %s234
        %s236 = smul.u32 2, %s23
        %p237 = scmp.lt.s32.totalorder %s22, 1
        %s238 = scalar_select %p237, %s22, 1
        %s239 = scalar_lea.vmem %s1, %s238
        %s240 = smul.u32 2, %s23
        %v242 = vld [vmem:[%s235] sm:$0xf]
        %v243 = vld [vmem:[%s2] sm:$0xf]
        %v244 = vld [vmem:[%s2 + $0x4] sm:$0xf]
        %v245 = vld [vmem:[%s3] sm:$0xff]
        %v246 = vld [vmem:[%s3 + $0x8] sm:$0xff]
        %248 = vset.pattern.permute.xlu0 0
        %249 = vperm.xlu0 %248, %v245
        %v250 = vpop.permute.xlu0 %249
        %253 = vset.pattern.permute.xlu0 0
        %254 = vperm.xlu0 %253, %v246
        %v255 = vpop.permute.xlu0 %254
        %v259 = vunpack.c.l.b16 %v243
        %v260 = vunpack.c.l.b16 %v244
        %v261 = vpack.c.b16 %v260, %v259
        %v264 = vunpack.c.l.s4 1983009808
        %v265 = vunpack.c.0.s8 %v264
        %v266 = vlaneseq
        %v267 = vshrl.u32 %v266, 7
        %v268 = vsub.s32 %v265, %v267
        %v269 = vrot.slane %v242, %v268
        %v270 = vcombine.high %v269, %v269
        %vm271 = vcmask 31744
        %v273 = vsel %vm271, %v261, 0
        %vm275 = vcmask 1041408
        %v277 = vsel %vm275, %v269, 0
        %v280 = vsel %vm275, %v270, 0
        %282 = vmatprep.subr.bf16.mxu0 0
        %283 = vmatpush1.bf16.msra.mxu0 0
        %284 = vmatprep.subr.bf16.mxu0 0
        %285 = vmatpush1.bf16.msra.mxu0 0
        %286 = vmatprep.subr.bf16.mxu0 0
        %287 = vmatpush1.bf16.msra.mxu0 0
        %288 = vmatprep.subr.bf16.mxu0 0
        %289 = vmatpush1.bf16.msra.mxu0 0
        %290 = vmatprep.subr.bf16.mxu0 0
        %291 = vmatpush1.bf16.msra.mxu0 0
        %292 = vmatprep.subr.bf16.mxu0 0
        %293 = vmatpush1.bf16.msra.mxu0 0
        %294 = vmatprep.subr.bf16.mxu0 0
        %295 = vmatpush1.bf16.msra.mxu0 0
        %296 = vmatprep.subr.bf16.mxu0 %v280
        %297 = vmatpush1.bf16.msra.mxu0 %v277
        %298 = vmatprep.subr.bf16.mxu0 0
        %299 = vmatpush2.bf16.msra.mxu0 0
        %300 = vmatprep.subr.bf16.mxu0 0
        %301 = vmatpush2.bf16.msra.mxu0 0
        %302 = vmatprep.subr.bf16.mxu0 0
        %303 = vmatpush2.bf16.msra.mxu0 0
        %304 = vmatprep.subr.bf16.mxu0 0
        %305 = vmatpush2.bf16.msra.mxu0 0
        %306 = vmatprep.subr.bf16.mxu0 0
        %307 = vmatpush2.bf16.msra.mxu0 0
        %308 = vmatprep.subr.bf16.mxu0 0
        %309 = vmatpush2.bf16.msra.mxu0 0
        %310 = vmatprep.subr.bf16.mxu0 0
        %311 = vmatpush2.bf16.msra.mxu0 0
        %312 = vmatprep.subr.bf16.mxu0 0
        %313 = vmatpush2.bf16.msra.mxu0 0
        %314 = vmatprep.mubr.bf16.mxu0 0
        %315 = vmatmul.mubr.bf16.gmra.mxu0 %v273
        %v316 = vpop.f32.mrf.mxu0
        %v317 = vadd.f32 %v250, %v316
        %v318 = vpop.f32.mrf.mxu0
        %v319 = vadd.f32 %v250, %v318
        %v320 = vpop.f32.mrf.mxu0
        %v321 = vadd.f32 %v255, %v320
        %v322 = vpop.f32.mrf.mxu0
        %v323 = vadd.f32 %v255, %v322
        %324 = vdwg.mxu0
        %v325 = vxor.u32 %v321, 2147483648
        %v326 = vxor.u32 %v323, 2147483648
        %v327 = vmul.f32 %v325, 1.442695
        %v328 = vpow.pop %v327
        %v329 = vmul.f32 %v326, 1.442695
        %v330 = vpow.pop %v329
        %v331 = vadd.f32 %v328, 1.0
        %v332 = vadd.f32 %v330, 1.0
        %v333 = vrcp.pop %v331
        %v334 = vmul.f32 1.0, %v333
        %v335 = vrcp.pop %v332
        %v336 = vmul.f32 1.0, %v335
        %v337 = vld [vmem:[%s239] sm:$0x1]
        %339 = vset.pattern.permute.xlu0 0
        %340 = vperm.xlu0 %339, %v337
        %v341 = vpop.permute.xlu0 %340
        %v343 = vlaneseq
        %v344 = vshrl.u32 %v343, 7
        %v345 = vsub.s32 0, %v344
        %v346 = vrot.slane %v341, %v345
        %v347 = vmul.f32 %v334, %v346
        %v348 = vmul.f32 %v336, %v346
        %v349 = vlaneseq
        %v350 = vshrl.u32 %v349, 7
        %v351 = vsub.s32 0, %v350
        %v352 = vrot.slane %v347, %v351
        %v353 = vlaneseq
        %v354 = vshrl.u32 %v353, 7
        %v355 = vsub.s32 0, %v354
        %v356 = vrot.slane %v348, %v355
        %v357 = vmul.f32 %v317, %v352
        %v358 = vmul.f32 %v319, %v356
        %359 = vset.pattern.permute.xlu0 1
        %360 = vperm.xlu0 %359, %v337
        %v361 = vpop.permute.xlu0 %360
        %v363 = vlaneseq
        %v364 = vshrl.u32 %v363, 7
        %v365 = vsub.s32 0, %v364
        %v366 = vrot.slane %v361, %v365
        %v367 = vmul.f32 %v334, %v366
        %v368 = vmul.f32 %v336, %v366
        %v369 = vlaneseq
        %v370 = vshrl.u32 %v369, 7
        %v371 = vsub.s32 1, %v370
        %v372 = vrot.slane %v367, %v371
        %v373 = vlaneseq
        %v374 = vshrl.u32 %v373, 7
        %v375 = vsub.s32 1, %v374
        %v376 = vrot.slane %v368, %v375
        %v377 = vmul.f32 %v317, %v372
        %v378 = vmul.f32 %v319, %v376
        %v381 = vrot.slane %v377, 4
        %v382 = vrot.slane %v378, 4
        %v385 = vadd.f32 %v357, %v381
        %v386 = vadd.f32 %v358, %v382
        %v389 = vcombine.low %v385, %v386
        %391 = vst [vmem:[%s226] sm:$0xff] %v389
        %s392 = sand.u32 %s136, 1
        %s393 = scalar_lea.sflag [#allocation3], %s392
        %s394 = sand.u32 %s136, 1
        %s395 = smul.addr %s394, 8
        %s396 = scalar_lea.vmem [#allocation2], %s395
        // Predicated region
        $region37: #{tpu_custom_call.1} parent=35 // pred_check
          %p397 = pneg %p146
        $region38: #{tpu_custom_call.1} parent=35 // pred_check_branch
          %399 = sbr.rel (%p397) target = $region40
        $region39: #{tpu_custom_call.1} parent=35 // pred_region
          %s400 = smul.u32 2, %s23
          %s402 = ssub.s32 128, 128
          %403 = vsyncadd %s393, %s402
          %s404 = smul.addr %s22, 2
          %s405 = sadd.s32 %s400, %s404
          %s406 = smul.addr %s405, 64
          %s407 = scalar_lea.hbm %s4, %s406
          %s409 = sshll.u32 %s396, 4
          %s410 = int_to_ptr.vmem [resolvable:$true] %s409
          %412 = dma.vmem_to_hbm [thread:$0]  %s410, 128, %s407, %s393
        $region40: #{tpu_custom_call.1} parent=35 // pred_fallthru
          _
      $region36: #{tpu_custom_call.1} parent=5 // pred_fallthru
        _
      %p413 = scmp.le.s32.totalorder 2, %s13
      // Predicated region
      $region41: #{tpu_custom_call.1} parent=5 // pred_check
        %p414 = pneg %p413
      $region42: #{tpu_custom_call.1} parent=5 // pred_check_branch
        %416 = sbr.rel (%p414) target = $region44
      $region43: #{tpu_custom_call.1} parent=5 // pred_region
        %s417 = ssub.s32 %s13, 2
        // Predicated region
        $region45: #{tpu_custom_call.1} parent=43 // pred_check
          %p418 = pneg %p152
        $region46: #{tpu_custom_call.1} parent=43 // pred_check_branch
          %420 = sbr.rel (%p418) target = $region48
        $region47: #{tpu_custom_call.1} parent=43 // pred_region
          %s421 = sand.u32 %s137, 1
          %s422 = scalar_lea.sflag [#allocation3], %s421
          %s423 = sand.u32 %s137, 1
          %s424 = smul.addr %s423, 8
          %s425 = scalar_lea.vmem [#allocation2], %s424
          %426 = dma.done %s422, 128
        $region48: #{tpu_custom_call.1} parent=43 // pred_fallthru
          _
      $region44: #{tpu_custom_call.1} parent=5 // pred_fallthru
        _
    $region6: #{tpu_custom_call.1} parent=1 // loop_footer
      %s17 = sadd.s32 1, %s13
    $region7: #{tpu_custom_call.1} parent=1 // loop_footer_branch
      %12 = sbr.rel target = $region3
    $region8: #{tpu_custom_call.1} parent=1 // loop_exit
      _
    %427 = vsyncpa [#allocation3], 1
    %s428 = scalar_lea.sflag [#allocation3], 1
    %429 = vsyncpa %s428, 1

</llo_original>
